<compile_context>
chip_gen: v5e
topology: v5e:2x2
jax: 0.10.0
libtpu: 0.0.40
codegen_flags: <defaults>
</compile_context>

<pallas_src>
import jax
import jax.numpy as jnp
from jax.experimental import pallas as pl
from jax.experimental.pallas import tpu as pltpu


def _identity_dma_kernel(x_hbm, y_hbm, sem):
    # Single whole-array HBM -> HBM DMA; no VMEM staging, no grid steps.
    cp = pltpu.make_async_copy(x_hbm, y_hbm, sem)
    cp.start()
    cp.wait()


def _identity_copy(x):
    """Explicit Pallas pass-through: one DMA copy of x into a fresh buffer."""
    return pl.pallas_call(
        _identity_dma_kernel,
        in_specs=[pl.BlockSpec(memory_space=pl.ANY)],
        out_specs=pl.BlockSpec(memory_space=pl.ANY),
        out_shape=jax.ShapeDtypeStruct(x.shape, x.dtype),
        scratch_shapes=[pltpu.SemaphoreType.DMA],
        cost_estimate=pl.CostEstimate(
            flops=0,
            transcendentals=0,
            bytes_accessed=2 * x.size * x.dtype.itemsize,
        ),
    )(x)


def deterministic_head_forward(x, *, use_kernel=False):
    """Pallas implementation of DeterministicHead.forward.

    Returns (y, y, None) with y == x, matching the PyTorch module.

    By default (use_kernel=False) this is a zero-cost pass-through that
    returns the input buffer itself — the optimal implementation of an
    identity op.  Set use_kernel=True to route through the explicit
    single-DMA Pallas kernel (materializes one copy of x).
    """
    if use_kernel:
        y = _identity_copy(x)
    else:
        y = x
    # TODO(synk): `dist` is None in the reference module; there is no
    # distribution object on the Pallas side, so None is returned as-is.
    return y, y, None


if __name__ == "__main__":
    key = jax.random.PRNGKey(0)
    batch, seq, hidden = 2, 8, 32  # DeterministicHead(n=32) on (B, S, n) activations
    x = jax.random.normal(key, (batch, seq, hidden), dtype=jnp.float32)

    # Fast path: no kernel, no copy.
    y0, y1, dist = deterministic_head_forward(x)
    assert y0 is x and y1 is x and dist is None

    # Kernel path: run the Pallas single-DMA pass-through once and verify.
    ky0, ky1, kdist = jax.jit(
        lambda a: deterministic_head_forward(a, use_kernel=True)
    )(x)
    jax.block_until_ready((ky0, ky1))

    assert ky0.shape == x.shape and ky1.shape == x.shape
    assert kdist is None
    assert jnp.array_equal(ky0, x) and jnp.array_equal(ky1, x)
    print("KERNEL_OK")
</pallas_src>

<mosaic_0001>
module attributes {stable_mosaic.version = 11 : i64} {
  func.func @_identity_dma_kernel(%arg0: memref<2x8x32xf32, #tpu.memory_space<any>>, %arg1: memref<2x8x32xf32, #tpu.memory_space<any>>, %arg2: memref<!tpu.dma_semaphore, #tpu.memory_space<semaphore_mem>>) attributes {dimension_semantics = [], scalar_prefetch = 0 : i64, scratch_operands = 1 : i64, tpu.core_type = #tpu.core_type<tc>} {
    tpu.enqueue_dma source(%arg0 : memref<2x8x32xf32, #tpu.memory_space<any>>) target(%arg1 : memref<2x8x32xf32, #tpu.memory_space<any>>) target_semaphore(%arg2 : memref<!tpu.dma_semaphore, #tpu.memory_space<semaphore_mem>>)
    tpu.wait_dma2 semaphore(%arg2 : memref<!tpu.dma_semaphore, #tpu.memory_space<semaphore_mem>>) src(%arg0 : memref<2x8x32xf32, #tpu.memory_space<any>>) dst(%arg1 : memref<2x8x32xf32, #tpu.memory_space<any>>)
    return
  }
}

</mosaic_0001>

<llo_original>
// kernel: _lambda_.1
$region0: #{_lambda_.1}
  #allocation0 [shape = 'u32[]', space=smem, size = 0x4, offset = 0x4, fixed_abs, tag = 'smem constant byte address 0x4 - core index']
  #allocation1 [shape = 'u32[72,128]{1,0:T(1,128)}', space=vmem, size = 0x9000, scoped, tag = 'internal scratch']
  #allocation2 [shape = 's32[1]{0}', space=sflag, size = 0x4, scoped, tag = 'scratch operand']
  #allocation3 [shape = 's32[]', space=sflag, size = 0x4, offset = 0, fixed_abs, tag = 'sflag constant byte address 0x0 - dummy sync flag']
  #allocation4 [shape = 's32[]', space=sflag, size = 0x4, offset = 0, fixed_abs, tag = 'sflag constant byte address 0x0 - dummy sync flag']
  #allocation5 [shape = 'u32[]', space=smem, size = 0x4, offset = 0x44, fixed_abs, tag = 'smem constant byte address 0x44 - assertion arg 0']
  #allocation6 [shape = 'u32[]', space=smem, size = 0x4, offset = 0x48, fixed_abs, tag = 'smem constant byte address 0x48 - assertion arg 1']
  %s0 = inlined_call_operand.hbm [shape: f32[2,8,32], index: 0, kind: input, shape index: {}]
  %s1 = inlined_call_operand.vmem [shape: f32[2,8,32], index: 1, kind: output, shape index: {}]
  %s2 = sld [smem:[#allocation0]]
  $region6: #{_lambda_.1} parent=0
    _
  %s4 = ssub.s32 1, %s2
  %s5 = scalar_select 0, %s4, %s2
  // Predicated region
  $region2: #{_lambda_.1} parent=0 // pred_check
    _
  $region3: #{_lambda_.1} parent=0 // pred_check_branch
    %7 = sbr.rel target = $region5
  $region4: #{_lambda_.1} parent=0 // pred_region
    %8 = sst [smem:[#allocation5]] [#allocation4]
    %9 = sst [smem:[#allocation6]] [#allocation3]
  $region5: #{_lambda_.1} parent=0 // pred_fallthru
    _
  %11 = shalt.err (0)
  %s13 = sshll.u32 %s0, 4
  %s14 = int_to_ptr.hbm [resolvable:$true] %s13
  %s15 = sshll.u32 %s1, 4
  %s16 = int_to_ptr.vmem [resolvable:$true] %s15
  %18 = dma.hbm_to_vmem [thread:$0]  %s14, 256, %s16, [#allocation2]
  %s19 = smul.u32 2, 8
  %s20 = smul.u32 %s19, 1
  %s21 = sshll.u32 %s20, 4
  %22 = dma.done [#allocation2], %s21
  %23 = vsyncmov [#allocation2]
  %s24 = vpop.sfrf %23
  %p25 = scmp.eq.s32.totalorder %s24, 0
  %p26 = pneg %p25
  %28 = shalt.err (%p26)

</llo_original>
